<compile_context>
chip_gen: v6e
topology: v6e:2x2x1
jax: 0.10.0
libtpu: 0.0.40
codegen_flags: <defaults>
</compile_context>

<pallas_src>
import functools
import math

import numpy as np
import jax
import jax.numpy as jnp
from jax.experimental import pallas as pl
from jax.experimental.pallas import tpu as pltpu


def _round_up(n, m):
    return ((n + m - 1) // m) * m


# ----------------------------- Pallas kernel --------------------------------
def film_mlp_kernel(
    xc_ref,                      # (Btile, in+cond) activations (f32 or bf16)
    fw_ref, fb_ref,              # fused [fc1 | film] weight (in+cond, 5H), bias (1, 5H)
    n1g_ref, n1b_ref,            # LayerNorm1 gamma/beta (1, H)
    fc2w_ref, fc2b_ref,          # fc2 weight (H, H), bias (1, H)
    n2g_ref, n2b_ref,            # LayerNorm2 gamma/beta (1, H)
    fc3w_ref, fc3b_ref,          # fc3 weight (H, out_pad), bias (1, out_pad)
    out_ref,                     # (Btile, out_pad)
    *, approx_gelu: bool,
):
    H = n1g_ref.shape[1]

    def linear(a, w_ref, b_ref):
        # MXU matmul in the weight dtype, f32 accumulate, f32 bias add.
        return jnp.dot(a.astype(w_ref.dtype), w_ref[...],
                       preferred_element_type=jnp.float32) + b_ref[...]

    if approx_gelu:
        def gelu(v):             # tanh form -> EUP slot (frees VALU); ~1e-3 off erf
            c = math.sqrt(2.0 / math.pi)
            return 0.5 * v * (1.0 + jnp.tanh(c * (v + 0.044715 * (v * v * v))))
    else:
        def gelu(v):             # exact erf form == torch.nn.functional.gelu default
            return 0.5 * v * (1.0 + jax.lax.erf(v * (1.0 / math.sqrt(2.0))))

    def layernorm(v, g_ref, b_ref, eps=1e-5):
        mu = jnp.mean(v, axis=-1, keepdims=True)
        c = v - mu
        var = jnp.mean(c * c, axis=-1, keepdims=True)
        return c * jax.lax.rsqrt(var + eps) * g_ref[...] + b_ref[...]

    # One fused matmul producing [fc1(x) | 1-scale1 | shift1 | 1-scale2 | shift2].
    fused = linear(xc_ref[...], fw_ref, fb_ref)        # (Btile, 5H), f32
    h      = fused[:, 0 * H:1 * H]                     # fc1(x)
    scale1 = fused[:, 1 * H:2 * H]                     # already (1 - scale1)
    shift1 = fused[:, 2 * H:3 * H]
    scale2 = fused[:, 3 * H:4 * H]                     # already (1 - scale2)
    shift2 = fused[:, 4 * H:5 * H]

    # block 1: norm1 -> gelu -> FiLM
    y = gelu(layernorm(h, n1g_ref, n1b_ref))
    y = y * scale1 + shift1

    # block 2: fc2 -> norm2 -> gelu -> FiLM
    y = gelu(layernorm(linear(y, fc2w_ref, fc2b_ref), n2g_ref, n2b_ref))
    y = y * scale2 + shift2

    # fc3 (output columns zero-padded to a lane-dense multiple of 128)
    out_ref[...] = linear(y, fc3w_ref, fc3b_ref).astype(out_ref.dtype)


# ----------------------------- parameter prep (done once) -------------------
def prepare_params(params, mm_dtype=jnp.float32):
    """Hoisted layout work (done ONCE): build the block-diagonal fused
    [fc1 | film1/film2] weight with the PyTorch 0::2 (scale) / 1::2 (shift)
    row permutation and the (1 - scale) fold, transpose Linear weights to
    (in, out), zero-pad fc3 to a lane-dense 128-wide output, cast MXU operands
    to mm_dtype. Biases / LayerNorm params stay f32."""
    f32 = lambda a: jnp.asarray(a, jnp.float32)

    H = params["fc1_w"].shape[0]
    in_features = params["fc1_w"].shape[1]
    cond_features = params["film1_w"].shape[1]
    out_features = params["fc3_w"].shape[0]
    out_pad = _round_up(out_features, 128)

    fc1_w, fc1_b = f32(params["fc1_w"]), f32(params["fc1_b"])          # (H,in), (H,)
    f1w, f1b = f32(params["film1_w"]), f32(params["film1_b"])          # (2H,cond), (2H,)
    f2w, f2b = f32(params["film2_w"]), f32(params["film2_b"])

    # einops.rearrange(film(cond), 'b (n a) -> a b n', a=2):
    #   scale = cols 0::2 -> weight rows 0::2 ; shift = cols 1::2 -> rows 1::2.
    # Fold (1 - scale): negate scale weight rows, bias -> 1 - bias.
    film_w = jnp.concatenate([-f1w[0::2], f1w[1::2], -f2w[0::2], f2w[1::2]], axis=0)  # (4H,cond)
    film_b = jnp.concatenate([1.0 - f1b[0::2], f1b[1::2],
                              1.0 - f2b[0::2], f2b[1::2]], axis=0)                    # (4H,)

    # Block-diagonal fused weight: xc = [x | cond] @ fused_w + fused_b -> (B, 5H).
    K = in_features + cond_features
    fused_w = jnp.zeros((K, 5 * H), jnp.float32)
    fused_w = fused_w.at[:in_features, :H].set(fc1_w.T)
    fused_w = fused_w.at[in_features:, H:].set(film_w.T)
    fused_b = jnp.concatenate([fc1_b, film_b])[None, :]                # (1, 5H)

    fc3_w, fc3_b = f32(params["fc3_w"]), f32(params["fc3_b"])          # (out,H), (out,)
    fc3_w_pad = jnp.zeros((H, out_pad), jnp.float32).at[:, :out_features].set(fc3_w.T)
    fc3_b_pad = jnp.zeros((1, out_pad), jnp.float32).at[0, :out_features].set(fc3_b)

    return dict(
        fused_w=fused_w.astype(mm_dtype), fused_b=fused_b,
        norm1_g=f32(params["norm1_g"])[None, :], norm1_b=f32(params["norm1_b"])[None, :],
        fc2_w=f32(params["fc2_w"]).T.astype(mm_dtype), fc2_b=f32(params["fc2_b"])[None, :],
        norm2_g=f32(params["norm2_g"])[None, :], norm2_b=f32(params["norm2_b"])[None, :],
        fc3_w=fc3_w_pad.astype(mm_dtype), fc3_b=fc3_b_pad,
        in_features=in_features, cond_features=cond_features,
        hidden=H, out_features=out_features, out_pad=out_pad,
    )


# ----------------------------- forward wrapper -------------------------------
def film_mlp_forward(x, cond, prep, *, block_b=1024, out_dtype=jnp.float32,
                     approx_gelu=False, slice_output=True,
                     dimension_semantics=("parallel",),
                     vmem_limit_bytes=32 * 1024 * 1024):
    B = x.shape[0]
    in_f, cond_f = prep["in_features"], prep["cond_features"]
    H, out_pad, out_features = prep["hidden"], prep["out_pad"], prep["out_features"]
    mm_dtype = prep["fused_w"].dtype

    # Fuse fc1 + FiLM inputs into one K=(in+cond) activation stream: one MXU
    # push sequence, one bias add, one input DMA stream. The concat is a tiny
    # (B, 64) copy; when the MXU operands are bf16 the cast fuses into the same
    # XLA op and halves the activation HBM read inside the kernel.
    xc = jnp.concatenate([x, cond], axis=-1)
    if mm_dtype != jnp.float32:
        xc = xc.astype(mm_dtype)

    # Large batch tile (perf review: >=1024 where B allows), multiple of 8.
    bb = _round_up(min(block_b, _round_up(B, 8)), 8)
    # No wrapper-side jnp.pad: partial final block is boundary-masked; rows are
    # fully independent (per-row matmul/layernorm/gelu), so garbage rows never
    # contaminate valid rows and their stores are masked.
    grid = (pl.cdiv(B, bb),)

    weights = (prep["fused_w"], prep["fused_b"],
               prep["norm1_g"], prep["norm1_b"],
               prep["fc2_w"], prep["fc2_b"],
               prep["norm2_g"], prep["norm2_b"],
               prep["fc3_w"], prep["fc3_b"])

    def resident(arr):
        # Full-array block + constant index_map -> stays in VMEM across all
        # grid steps (no re-DMA of weights).
        return pl.BlockSpec(arr.shape, lambda i: (0, 0))

    in_specs = ([pl.BlockSpec((bb, in_f + cond_f), lambda i: (i, 0))]
                + [resident(w) for w in weights])

    act_bytes = jnp.dtype(xc.dtype).itemsize
    out_bytes = jnp.dtype(out_dtype).itemsize
    w_bytes = sum(int(w.size) * jnp.dtype(w.dtype).itemsize for w in weights)
    cost = pl.CostEstimate(
        flops=2 * B * ((in_f + cond_f) * 5 * H + H * H + H * out_pad),
        transcendentals=2 * B * H,
        bytes_accessed=B * (in_f + cond_f) * act_bytes + B * out_pad * out_bytes + w_bytes,
    )

    # TODO(synk): on v7x pass dimension_semantics=(pltpu.CORE_PARALLEL,) so the
    # batch grid is actually split across the two TensorCores ("parallel" vs
    # "arbitrary" is a measured no-op); kept "parallel" as the portable default.
    kernel = functools.partial(film_mlp_kernel, approx_gelu=approx_gelu)
    out = pl.pallas_call(
        kernel,
        out_shape=jax.ShapeDtypeStruct((B, out_pad), out_dtype),
        grid=grid,
        in_specs=in_specs,
        out_specs=pl.BlockSpec((bb, out_pad), lambda i: (i, 0)),
        compiler_params=pltpu.CompilerParams(
            dimension_semantics=dimension_semantics,
            vmem_limit_bytes=vmem_limit_bytes,
        ),
        cost_estimate=cost,
    )(xc, *weights)

    # Callers that can consume the lane-padded (B, out_pad) buffer directly
    # should pass slice_output=False and avoid this extra HBM pass.
    if slice_output:
        out = out[:, :out_features]
    return out


# ----------------------------- reference (pure JAX) ---------------------------
def film_mlp_reference(x, cond, params, approx_gelu=False):
    def lin(a, w, b):
        return jnp.dot(a, w.T, precision=jax.lax.Precision.HIGHEST) + b

    def gelu(v):
        if approx_gelu:
            c = math.sqrt(2.0 / math.pi)
            return 0.5 * v * (1.0 + jnp.tanh(c * (v + 0.044715 * v ** 3)))
        return 0.5 * v * (1.0 + jax.lax.erf(v / math.sqrt(2.0)))

    def ln(v, g, b, eps=1e-5):
        mu = v.mean(-1, keepdims=True)
        var = ((v - mu) ** 2).mean(-1, keepdims=True)
        return (v - mu) / jnp.sqrt(var + eps) * g + b

    y = gelu(ln(lin(x, params["fc1_w"], params["fc1_b"]),
                params["norm1_g"], params["norm1_b"]))
    f = lin(cond, params["film1_w"], params["film1_b"])
    scale, shift = f[:, 0::2], f[:, 1::2]
    y = y * (1 - scale) + shift
    y = gelu(ln(lin(y, params["fc2_w"], params["fc2_b"]),
                params["norm2_g"], params["norm2_b"]))
    f = lin(cond, params["film2_w"], params["film2_b"])
    scale, shift = f[:, 0::2], f[:, 1::2]
    y = y * (1 - scale) + shift
    return lin(y, params["fc3_w"], params["fc3_b"])


# ----------------------------- main -------------------------------------------
if __name__ == "__main__":
    in_features = 32
    cond_features = 32
    hidden_features = in_features * 4      # 128 (module default)
    out_features = in_features             # 32  (module default)

    key = jax.random.PRNGKey(0)
    ks = iter(jax.random.split(key, 16))

    def w(shape, std=0.02):
        return std * jax.random.normal(next(ks), shape, dtype=jnp.float32)

    # Deterministic synthetic init (shapes per FilmMlpv3.__init__).
    # NOTE: the module zero-inits the film weights; nonzero here so the FiLM
    # path is actually exercised. Forward-pass semantics are unchanged.
    params = dict(
        fc1_w=w((hidden_features, in_features)),    fc1_b=w((hidden_features,)),
        norm1_g=jnp.ones((hidden_features,), jnp.float32),
        norm1_b=jnp.zeros((hidden_features,), jnp.float32),
        film1_w=w((2 * hidden_features, cond_features)), film1_b=w((2 * hidden_features,)),
        fc2_w=w((hidden_features, hidden_features)), fc2_b=w((hidden_features,)),
        norm2_g=jnp.ones((hidden_features,), jnp.float32),
        norm2_b=jnp.zeros((hidden_features,), jnp.float32),
        film2_w=w((2 * hidden_features, cond_features)), film2_b=w((2 * hidden_features,)),
        fc3_w=w((out_features, hidden_features)),   fc3_b=w((out_features,)),
    )

    prep_f32 = prepare_params(params, mm_dtype=jnp.float32)
    prep_bf16 = prepare_params(params, mm_dtype=jnp.bfloat16)

    # --- 1) small batch (single grid step), f32 MXU operands, exact erf GELU ---
    B = 8
    x = jax.random.normal(next(ks), (B, in_features), dtype=jnp.float32)
    cond = jax.random.normal(next(ks), (B, cond_features), dtype=jnp.float32)
    out = jax.block_until_ready(film_mlp_forward(x, cond, prep_f32))
    ref = film_mlp_reference(x, cond, params)
    np.testing.assert_allclose(np.asarray(out), np.asarray(ref), rtol=1e-3, atol=1e-3)

    # --- 2) larger, non-multiple batch: multi-step grid + masked final block ---
    B2 = 272
    x2 = jax.random.normal(next(ks), (B2, in_features), dtype=jnp.float32)
    cond2 = jax.random.normal(next(ks), (B2, cond_features), dtype=jnp.float32)
    out2 = jax.block_until_ready(film_mlp_forward(x2, cond2, prep_f32, block_b=128))
    ref2 = film_mlp_reference(x2, cond2, params)
    np.testing.assert_allclose(np.asarray(out2), np.asarray(ref2), rtol=1e-3, atol=1e-3)

    # --- 3) bf16 MXU operands (v6e/v7x fast path); activations cast in wrapper --
    out3 = jax.block_until_ready(film_mlp_forward(x2, cond2, prep_bf16))
    np.testing.assert_allclose(np.asarray(out3), np.asarray(ref2), rtol=3e-2, atol=3e-2)

    # --- 4) tanh-approx GELU (EUP path) vs a matching tanh reference -----------
    out4 = jax.block_until_ready(film_mlp_forward(x, cond, prep_f32, approx_gelu=True))
    ref4 = film_mlp_reference(x, cond, params, approx_gelu=True)
    np.testing.assert_allclose(np.asarray(out4), np.asarray(ref4), rtol=1e-3, atol=1e-3)

    print("KERNEL_OK")
</pallas_src>

<mosaic_0001>
module attributes {stable_mosaic.version = 11 : i64} {
  func.func @film_mlp_kernel(%arg0: i32, %arg1: memref<8x64xf32, #tpu.memory_space<vmem>>, %arg2: memref<64x640xf32, #tpu.memory_space<vmem>>, %arg3: memref<1x640xf32, #tpu.memory_space<vmem>>, %arg4: memref<1x128xf32, #tpu.memory_space<vmem>>, %arg5: memref<1x128xf32, #tpu.memory_space<vmem>>, %arg6: memref<128x128xf32, #tpu.memory_space<vmem>>, %arg7: memref<1x128xf32, #tpu.memory_space<vmem>>, %arg8: memref<1x128xf32, #tpu.memory_space<vmem>>, %arg9: memref<1x128xf32, #tpu.memory_space<vmem>>, %arg10: memref<128x128xf32, #tpu.memory_space<vmem>>, %arg11: memref<1x128xf32, #tpu.memory_space<vmem>>, %arg12: memref<8x128xf32, #tpu.memory_space<vmem>>) attributes {dimension_semantics = [#tpu.dimension_semantics<parallel>], iteration_bounds = array<i64: 1>, scalar_prefetch = 0 : i64, scratch_operands = 0 : i64, tpu.core_type = #tpu.core_type<tc>, window_params = [{transform_indices = @transform_0, window_bounds = array<i64: 8, 64>}, {pipeline_mode = #tpu.pipeline_mode<synchronous>, transform_indices = @transform_1, window_bounds = array<i64: 64, 640>}, {pipeline_mode = #tpu.pipeline_mode<synchronous>, transform_indices = @transform_2, window_bounds = array<i64: 1, 640>}, {pipeline_mode = #tpu.pipeline_mode<synchronous>, transform_indices = @transform_3, window_bounds = array<i64: 1, 128>}, {pipeline_mode = #tpu.pipeline_mode<synchronous>, transform_indices = @transform_4, window_bounds = array<i64: 1, 128>}, {pipeline_mode = #tpu.pipeline_mode<synchronous>, transform_indices = @transform_5, window_bounds = array<i64: 128, 128>}, {pipeline_mode = #tpu.pipeline_mode<synchronous>, transform_indices = @transform_6, window_bounds = array<i64: 1, 128>}, {pipeline_mode = #tpu.pipeline_mode<synchronous>, transform_indices = @transform_7, window_bounds = array<i64: 1, 128>}, {pipeline_mode = #tpu.pipeline_mode<synchronous>, transform_indices = @transform_8, window_bounds = array<i64: 1, 128>}, {pipeline_mode = #tpu.pipeline_mode<synchronous>, transform_indices = @transform_9, window_bounds = array<i64: 128, 128>}, {pipeline_mode = #tpu.pipeline_mode<synchronous>, transform_indices = @transform_10, window_bounds = array<i64: 1, 128>}, {transform_indices = @transform_11, window_bounds = array<i64: 8, 128>}]} {
    %c0 = arith.constant 0 : index
    %c0_0 = arith.constant 0 : index
    %0 = vector.load %arg1[%c0, %c0_0] : memref<8x64xf32, #tpu.memory_space<vmem>>, vector<8x64xf32>
    %c0_1 = arith.constant 0 : index
    %c0_2 = arith.constant 0 : index
    %1 = vector.load %arg2[%c0_1, %c0_2] : memref<64x640xf32, #tpu.memory_space<vmem>>, vector<64x640xf32>
    %cst = arith.constant dense<0.000000e+00> : vector<8x640xf32>
    %2 = tpu.matmul %0, %1, %cst {dimension_numbers = #tpu.dot_dimension_numbers<[1], [0], [0], [1], [0, 0, 1, 1], [], []>} : vector<8x64xf32>, vector<64x640xf32>, vector<8x640xf32> -> vector<8x640xf32>
    %c0_3 = arith.constant 0 : index
    %c0_4 = arith.constant 0 : index
    %3 = vector.load %arg3[%c0_3, %c0_4] : memref<1x640xf32, #tpu.memory_space<vmem>>, vector<1x640xf32>
    %4 = vector.broadcast %3 : vector<1x640xf32> to vector<8x640xf32>
    %5 = arith.addf %2, %4 : vector<8x640xf32>
    %6 = vector.extract_strided_slice %5 {offsets = [0, 0], sizes = [8, 128], strides = [1, 1]} : vector<8x640xf32> to vector<8x128xf32>
    %7 = vector.extract_strided_slice %5 {offsets = [0, 128], sizes = [8, 128], strides = [1, 1]} : vector<8x640xf32> to vector<8x128xf32>
    %8 = vector.extract_strided_slice %5 {offsets = [0, 256], sizes = [8, 128], strides = [1, 1]} : vector<8x640xf32> to vector<8x128xf32>
    %9 = vector.extract_strided_slice %5 {offsets = [0, 384], sizes = [8, 128], strides = [1, 1]} : vector<8x640xf32> to vector<8x128xf32>
    %10 = vector.extract_strided_slice %5 {offsets = [0, 512], sizes = [8, 128], strides = [1, 1]} : vector<8x640xf32> to vector<8x128xf32>
    %cst_5 = arith.constant dense<0.000000e+00> : vector<8xf32>
    %11 = vector.multi_reduction <add>, %6, %cst_5 [1] : vector<8x128xf32> to vector<8xf32>
    %12 = vector.shape_cast %11 : vector<8xf32> to vector<8x1xf32>
    %cst_6 = arith.constant 1.280000e+02 : f32
    %13 = vector.broadcast %cst_6 : f32 to vector<8x1xf32>
    %14 = arith.divf %12, %13 : vector<8x1xf32>
    %15 = vector.broadcast %14 : vector<8x1xf32> to vector<8x128xf32>
    %16 = arith.subf %6, %15 : vector<8x128xf32>
    %17 = arith.mulf %16, %16 : vector<8x128xf32>
    %cst_7 = arith.constant dense<0.000000e+00> : vector<8xf32>
    %18 = vector.multi_reduction <add>, %17, %cst_7 [1] : vector<8x128xf32> to vector<8xf32>
    %19 = vector.shape_cast %18 : vector<8xf32> to vector<8x1xf32>
    %cst_8 = arith.constant 1.280000e+02 : f32
    %20 = vector.broadcast %cst_8 : f32 to vector<8x1xf32>
    %21 = arith.divf %19, %20 : vector<8x1xf32>
    %cst_9 = arith.constant 9.99999974E-6 : f32
    %22 = vector.broadcast %cst_9 : f32 to vector<8x1xf32>
    %23 = arith.addf %21, %22 : vector<8x1xf32>
    %24 = math.rsqrt %23 : vector<8x1xf32>
    %25 = vector.broadcast %24 : vector<8x1xf32> to vector<8x128xf32>
    %26 = arith.mulf %16, %25 : vector<8x128xf32>
    %c0_10 = arith.constant 0 : index
    %c0_11 = arith.constant 0 : index
    %27 = vector.load %arg4[%c0_10, %c0_11] : memref<1x128xf32, #tpu.memory_space<vmem>>, vector<1x128xf32>
    %28 = vector.broadcast %27 : vector<1x128xf32> to vector<8x128xf32>
    %29 = arith.mulf %26, %28 : vector<8x128xf32>
    %c0_12 = arith.constant 0 : index
    %c0_13 = arith.constant 0 : index
    %30 = vector.load %arg5[%c0_12, %c0_13] : memref<1x128xf32, #tpu.memory_space<vmem>>, vector<1x128xf32>
    %31 = vector.broadcast %30 : vector<1x128xf32> to vector<8x128xf32>
    %32 = arith.addf %29, %31 : vector<8x128xf32>
    %cst_14 = arith.constant 5.000000e-01 : f32
    %33 = vector.broadcast %cst_14 : f32 to vector<8x128xf32>
    %34 = arith.mulf %33, %32 : vector<8x128xf32>
    %cst_15 = arith.constant 0.707106769 : f32
    %35 = vector.broadcast %cst_15 : f32 to vector<8x128xf32>
    %36 = arith.mulf %32, %35 : vector<8x128xf32>
    %37 = math.erf %36 : vector<8x128xf32>
    %cst_16 = arith.constant 1.000000e+00 : f32
    %38 = vector.broadcast %cst_16 : f32 to vector<8x128xf32>
    %39 = arith.addf %38, %37 : vector<8x128xf32>
    %40 = arith.mulf %34, %39 : vector<8x128xf32>
    %41 = arith.mulf %40, %7 : vector<8x128xf32>
    %42 = arith.addf %41, %8 : vector<8x128xf32>
    %c0_17 = arith.constant 0 : index
    %c0_18 = arith.constant 0 : index
    %43 = vector.load %arg6[%c0_17, %c0_18] : memref<128x128xf32, #tpu.memory_space<vmem>>, vector<128x128xf32>
    %cst_19 = arith.constant dense<0.000000e+00> : vector<8x128xf32>
    %44 = tpu.matmul %42, %43, %cst_19 {dimension_numbers = #tpu.dot_dimension_numbers<[1], [0], [0], [1], [0, 0, 1, 1], [], []>} : vector<8x128xf32>, vector<128x128xf32>, vector<8x128xf32> -> vector<8x128xf32>
    %c0_20 = arith.constant 0 : index
    %c0_21 = arith.constant 0 : index
    %45 = vector.load %arg7[%c0_20, %c0_21] : memref<1x128xf32, #tpu.memory_space<vmem>>, vector<1x128xf32>
    %46 = vector.broadcast %45 : vector<1x128xf32> to vector<8x128xf32>
    %47 = arith.addf %44, %46 : vector<8x128xf32>
    %cst_22 = arith.constant dense<0.000000e+00> : vector<8xf32>
    %48 = vector.multi_reduction <add>, %47, %cst_22 [1] : vector<8x128xf32> to vector<8xf32>
    %49 = vector.shape_cast %48 : vector<8xf32> to vector<8x1xf32>
    %cst_23 = arith.constant 1.280000e+02 : f32
    %50 = vector.broadcast %cst_23 : f32 to vector<8x1xf32>
    %51 = arith.divf %49, %50 : vector<8x1xf32>
    %52 = vector.broadcast %51 : vector<8x1xf32> to vector<8x128xf32>
    %53 = arith.subf %47, %52 : vector<8x128xf32>
    %54 = arith.mulf %53, %53 : vector<8x128xf32>
    %cst_24 = arith.constant dense<0.000000e+00> : vector<8xf32>
    %55 = vector.multi_reduction <add>, %54, %cst_24 [1] : vector<8x128xf32> to vector<8xf32>
    %56 = vector.shape_cast %55 : vector<8xf32> to vector<8x1xf32>
    %cst_25 = arith.constant 1.280000e+02 : f32
    %57 = vector.broadcast %cst_25 : f32 to vector<8x1xf32>
    %58 = arith.divf %56, %57 : vector<8x1xf32>
    %cst_26 = arith.constant 9.99999974E-6 : f32
    %59 = vector.broadcast %cst_26 : f32 to vector<8x1xf32>
    %60 = arith.addf %58, %59 : vector<8x1xf32>
    %61 = math.rsqrt %60 : vector<8x1xf32>
    %62 = vector.broadcast %61 : vector<8x1xf32> to vector<8x128xf32>
    %63 = arith.mulf %53, %62 : vector<8x128xf32>
    %c0_27 = arith.constant 0 : index
    %c0_28 = arith.constant 0 : index
    %64 = vector.load %arg8[%c0_27, %c0_28] : memref<1x128xf32, #tpu.memory_space<vmem>>, vector<1x128xf32>
    %65 = vector.broadcast %64 : vector<1x128xf32> to vector<8x128xf32>
    %66 = arith.mulf %63, %65 : vector<8x128xf32>
    %c0_29 = arith.constant 0 : index
    %c0_30 = arith.constant 0 : index
    %67 = vector.load %arg9[%c0_29, %c0_30] : memref<1x128xf32, #tpu.memory_space<vmem>>, vector<1x128xf32>
    %68 = vector.broadcast %67 : vector<1x128xf32> to vector<8x128xf32>
    %69 = arith.addf %66, %68 : vector<8x128xf32>
    %cst_31 = arith.constant 5.000000e-01 : f32
    %70 = vector.broadcast %cst_31 : f32 to vector<8x128xf32>
    %71 = arith.mulf %70, %69 : vector<8x128xf32>
    %cst_32 = arith.constant 0.707106769 : f32
    %72 = vector.broadcast %cst_32 : f32 to vector<8x128xf32>
    %73 = arith.mulf %69, %72 : vector<8x128xf32>
    %74 = math.erf %73 : vector<8x128xf32>
    %cst_33 = arith.constant 1.000000e+00 : f32
    %75 = vector.broadcast %cst_33 : f32 to vector<8x128xf32>
    %76 = arith.addf %75, %74 : vector<8x128xf32>
    %77 = arith.mulf %71, %76 : vector<8x128xf32>
    %78 = arith.mulf %77, %9 : vector<8x128xf32>
    %79 = arith.addf %78, %10 : vector<8x128xf32>
    %c0_34 = arith.constant 0 : index
    %c0_35 = arith.constant 0 : index
    %80 = vector.load %arg10[%c0_34, %c0_35] : memref<128x128xf32, #tpu.memory_space<vmem>>, vector<128x128xf32>
    %cst_36 = arith.constant dense<0.000000e+00> : vector<8x128xf32>
    %81 = tpu.matmul %79, %80, %cst_36 {dimension_numbers = #tpu.dot_dimension_numbers<[1], [0], [0], [1], [0, 0, 1, 1], [], []>} : vector<8x128xf32>, vector<128x128xf32>, vector<8x128xf32> -> vector<8x128xf32>
    %c0_37 = arith.constant 0 : index
    %c0_38 = arith.constant 0 : index
    %82 = vector.load %arg11[%c0_37, %c0_38] : memref<1x128xf32, #tpu.memory_space<vmem>>, vector<1x128xf32>
    %83 = vector.broadcast %82 : vector<1x128xf32> to vector<8x128xf32>
    %84 = arith.addf %81, %83 : vector<8x128xf32>
    %c0_39 = arith.constant 0 : index
    %c0_40 = arith.constant 0 : index
    %85 = vector.load %arg12[%c0_39, %c0_40] : memref<8x128xf32, #tpu.memory_space<vmem>>, vector<8x128xf32>
    tpu.vector_store %arg12[%c0_39, %c0_40], %84 {strides = array<i32>} : memref<8x128xf32, #tpu.memory_space<vmem>>, vector<8x128xf32>,
    return
  }
  func.func @transform_0(%arg0: i32) -> (i32, i32) {
    %c0_i32 = arith.constant 0 : i32
    %c0_i32_0 = arith.constant 0 : i32
    return %arg0, %c0_i32 : i32, i32
  }
  func.func @transform_1(%arg0: i32) -> (i32, i32) {
    %c0_i32 = arith.constant 0 : i32
    %c0_i32_0 = arith.constant 0 : i32
    %c0_i32_1 = arith.constant 0 : i32
    return %c0_i32, %c0_i32_0 : i32, i32
  }
  func.func @transform_2(%arg0: i32) -> (i32, i32) {
    %c0_i32 = arith.constant 0 : i32
    %c0_i32_0 = arith.constant 0 : i32
    %c0_i32_1 = arith.constant 0 : i32
    return %c0_i32, %c0_i32_0 : i32, i32
  }
  func.func @transform_3(%arg0: i32) -> (i32, i32) {
    %c0_i32 = arith.constant 0 : i32
    %c0_i32_0 = arith.constant 0 : i32
    %c0_i32_1 = arith.constant 0 : i32
    return %c0_i32, %c0_i32_0 : i32, i32
  }
  func.func @transform_4(%arg0: i32) -> (i32, i32) {
    %c0_i32 = arith.constant 0 : i32
    %c0_i32_0 = arith.constant 0 : i32
    %c0_i32_1 = arith.constant 0 : i32
    return %c0_i32, %c0_i32_0 : i32, i32
  }
  func.func @transform_5(%arg0: i32) -> (i32, i32) {
    %c0_i32 = arith.constant 0 : i32
    %c0_i32_0 = arith.constant 0 : i32
    %c0_i32_1 = arith.constant 0 : i32
    return %c0_i32, %c0_i32_0 : i32, i32
  }
  func.func @transform_6(%arg0: i32) -> (i32, i32) {
    %c0_i32 = arith.constant 0 : i32
    %c0_i32_0 = arith.constant 0 : i32
    %c0_i32_1 = arith.constant 0 : i32
    return %c0_i32, %c0_i32_0 : i32, i32
  }
  func.func @transform_7(%arg0: i32) -> (i32, i32) {
    %c0_i32 = arith.constant 0 : i32
    %c0_i32_0 = arith.constant 0 : i32
    %c0_i32_1 = arith.constant 0 : i32
    return %c0_i32, %c0_i32_0 : i32, i32
  }
  func.func @transform_8(%arg0: i32) -> (i32, i32) {
    %c0_i32 = arith.constant 0 : i32
    %c0_i32_0 = arith.constant 0 : i32
    %c0_i32_1 = arith.constant 0 : i32
    return %c0_i32, %c0_i32_0 : i32, i32
  }
  func.func @transform_9(%arg0: i32) -> (i32, i32) {
    %c0_i32 = arith.constant 0 : i32
    %c0_i32_0 = arith.constant 0 : i32
    %c0_i32_1 = arith.constant 0 : i32
    return %c0_i32, %c0_i32_0 : i32, i32
  }
  func.func @transform_10(%arg0: i32) -> (i32, i32) {
    %c0_i32 = arith.constant 0 : i32
    %c0_i32_0 = arith.constant 0 : i32
    %c0_i32_1 = arith.constant 0 : i32
    return %c0_i32, %c0_i32_0 : i32, i32
  }
  func.func @transform_11(%arg0: i32) -> (i32, i32) {
    %c0_i32 = arith.constant 0 : i32
    %c0_i32_0 = arith.constant 0 : i32
    return %arg0, %c0_i32 : i32, i32
  }
}

</mosaic_0001>

<llo_original>
// kernel: tpu_custom_call.1
$region0: #{tpu_custom_call.1}
  #allocation0 [shape = 'u32[]', space=smem, size = 0x4, offset = 0x4, fixed_abs, tag = 'smem constant byte address 0x4 - core index']
  #allocation1 [shape = 'u32[144,128]{1,0:T(1,128)}', space=vmem, size = 0x12000, scoped, tag = 'internal scratch']
  %s0 = inlined_call_operand.hbm [shape: f32[8,64], index: 0, kind: input, shape index: {}]
  %s1 = inlined_call_operand.hbm [shape: f32[64,640], index: 1, kind: input, shape index: {}]
  %s2 = inlined_call_operand.hbm [shape: f32[1,640], index: 2, kind: input, shape index: {}]
  %s3 = inlined_call_operand.vmem [shape: f32[1,128], index: 3, kind: input, shape index: {}]
  %s4 = inlined_call_operand.vmem [shape: f32[1,128], index: 4, kind: input, shape index: {}]
  %s5 = inlined_call_operand.hbm [shape: f32[128,128], index: 5, kind: input, shape index: {}]
  %s6 = inlined_call_operand.vmem [shape: f32[1,128], index: 6, kind: input, shape index: {}]
  %s7 = inlined_call_operand.vmem [shape: f32[1,128], index: 7, kind: input, shape index: {}]
  %s8 = inlined_call_operand.vmem [shape: f32[1,128], index: 8, kind: input, shape index: {}]
  %s9 = inlined_call_operand.hbm [shape: f32[128,128], index: 9, kind: input, shape index: {}]
  %s10 = inlined_call_operand.vmem [shape: f32[1,128], index: 10, kind: input, shape index: {}]
  %s11 = inlined_call_operand.hbm [shape: f32[8,128], index: 11, kind: output, shape index: {}]
  %s12 = sld [smem:[#allocation0]]
  $region74: #{tpu_custom_call.1} parent=0
    _
  %s14 = ssub.s32 1, %s12
  %s15 = scalar_select 0, %s14, %s12
  $region1: #{tpu_custom_call.1} parent=0
    #allocation2 [shape = 'u8[4096]{0}', space=vmem, size = 0x1000, scoped, tag = 'input window, operand 0, single buffered']
    #allocation3 [shape = 's32[1]{0}', space=sflag, size = 0x4, scoped, tag = 'scoped memory for tpu_custom_call.1']
    #allocation4 [shape = 's32[1]{0}', space=sflag, size = 0x4, scoped, tag = 'scoped memory for tpu_custom_call.1']
    #allocation5 [shape = 'u8[163840]{0}', space=vmem, size = 0x28000, scoped, tag = 'input window, operand 1, single buffered']
    #allocation6 [shape = 's32[1]{0}', space=sflag, size = 0x4, scoped, tag = 'scoped memory for tpu_custom_call.1']
    #allocation7 [shape = 'u8[2560]{0}', space=vmem, size = 0xc00, scoped, tag = 'input window, operand 2, single buffered']
    #allocation8 [shape = 'u8[65536]{0}', space=vmem, size = 0x10000, scoped, tag = 'input window, operand 5, single buffered']
    #allocation9 [shape = 's32[1]{0}', space=sflag, size = 0x4, scoped, tag = 'scoped memory for tpu_custom_call.1']
    #allocation10 [shape = 'u8[65536]{0}', space=vmem, size = 0x10000, scoped, tag = 'input window, operand 9, single buffered']
    #allocation11 [shape = 'u8[4096]{0}', space=vmem, size = 0x1000, scoped, tag = 'output window, operand 0, single buffered']
    %16 = vsyncpa [#allocation3], 0
    %17 = vsyncpa [#allocation6], 0
    %18 = vsyncpa [#allocation9], 0
    %19 = vsyncpa [#allocation4], 0
    // Predicated region
    $region2: #{tpu_custom_call.1} parent=1 // pred_check
      _
    $region3: #{tpu_custom_call.1} parent=1 // pred_check_branch
      %21 = sbr.rel (0) target = $region5
    $region4: #{tpu_custom_call.1} parent=1 // pred_region
      %s23 = ssub.s32 128, 128
      %24 = vsyncadd [#allocation3], %s23
      %s26 = sshll.u32 [#allocation2], 4
      %s27 = int_to_ptr.vmem [resolvable:$true] %s26
      %29 = dma.hbm_to_vmem [thread:$0]  %s0, 128, %s27, [#allocation3]
    $region5: #{tpu_custom_call.1} parent=1 // pred_fallthru
      _
    // Predicated region
    $region6: #{tpu_custom_call.1} parent=1 // pred_check
      _
    $region7: #{tpu_custom_call.1} parent=1 // pred_check_branch
      %31 = sbr.rel (0) target = $region9
    $region8: #{tpu_custom_call.1} parent=1 // pred_region
      %s33 = ssub.s32 5120, 5120
      %34 = vsyncadd [#allocation6], %s33
      %s35 = sshll.u32 [#allocation5], 4
      %s36 = int_to_ptr.vmem [resolvable:$true] %s35
      %41 = dma.hbm_to_vmem [thread:$0]  %s1, 5120, %s36, [#allocation6], 640, 640, 40
    $region9: #{tpu_custom_call.1} parent=1 // pred_fallthru
      _
    // Predicated region
    $region10: #{tpu_custom_call.1} parent=1 // pred_check
      _
    $region11: #{tpu_custom_call.1} parent=1 // pred_check_branch
      %43 = sbr.rel (0) target = $region13
    $region12: #{tpu_custom_call.1} parent=1 // pred_region
      %s45 = ssub.s32 80, 80
      %46 = vsyncadd [#allocation6], %s45
      %s48 = sshll.u32 [#allocation7], 4
      %s49 = int_to_ptr.vmem [resolvable:$true] %s48
      %51 = dma.hbm_to_vmem [thread:$0]  %s2, 80, %s49, [#allocation6]
    $region13: #{tpu_custom_call.1} parent=1 // pred_fallthru
      _
    // Predicated region
    $region14: #{tpu_custom_call.1} parent=1 // pred_check
      _
    $region15: #{tpu_custom_call.1} parent=1 // pred_check_branch
      %53 = sbr.rel (0) target = $region17
    $region16: #{tpu_custom_call.1} parent=1 // pred_region
      _
    $region17: #{tpu_custom_call.1} parent=1 // pred_fallthru
      _
    // Predicated region
    $region18: #{tpu_custom_call.1} parent=1 // pred_check
      _
    $region19: #{tpu_custom_call.1} parent=1 // pred_check_branch
      %55 = sbr.rel (0) target = $region21
    $region20: #{tpu_custom_call.1} parent=1 // pred_region
      _
    $region21: #{tpu_custom_call.1} parent=1 // pred_fallthru
      _
    // Predicated region
    $region22: #{tpu_custom_call.1} parent=1 // pred_check
      _
    $region23: #{tpu_custom_call.1} parent=1 // pred_check_branch
      %57 = sbr.rel (0) target = $region25
    $region24: #{tpu_custom_call.1} parent=1 // pred_region
      %s59 = ssub.s32 2048, 2048
      %60 = vsyncadd [#allocation9], %s59
      %s61 = sshll.u32 [#allocation8], 4
      %s62 = int_to_ptr.vmem [resolvable:$true] %s61
      %67 = dma.hbm_to_vmem [thread:$0]  %s5, 2048, %s62, [#allocation9], 128, 128, 8
    $region25: #{tpu_custom_call.1} parent=1 // pred_fallthru
      _
    // Predicated region
    $region26: #{tpu_custom_call.1} parent=1 // pred_check
      _
    $region27: #{tpu_custom_call.1} parent=1 // pred_check_branch
      %69 = sbr.rel (0) target = $region29
    $region28: #{tpu_custom_call.1} parent=1 // pred_region
      _
    $region29: #{tpu_custom_call.1} parent=1 // pred_fallthru
      _
    // Predicated region
    $region30: #{tpu_custom_call.1} parent=1 // pred_check
      _
    $region31: #{tpu_custom_call.1} parent=1 // pred_check_branch
      %71 = sbr.rel (0) target = $region33
    $region32: #{tpu_custom_call.1} parent=1 // pred_region
      _
    $region33: #{tpu_custom_call.1} parent=1 // pred_fallthru
      _
    // Predicated region
    $region34: #{tpu_custom_call.1} parent=1 // pred_check
      _
    $region35: #{tpu_custom_call.1} parent=1 // pred_check_branch
      %73 = sbr.rel (0) target = $region37
    $region36: #{tpu_custom_call.1} parent=1 // pred_region
      _
    $region37: #{tpu_custom_call.1} parent=1 // pred_fallthru
      _
    // Predicated region
    $region38: #{tpu_custom_call.1} parent=1 // pred_check
      _
    $region39: #{tpu_custom_call.1} parent=1 // pred_check_branch
      %75 = sbr.rel (0) target = $region41
    $region40: #{tpu_custom_call.1} parent=1 // pred_region
      %s77 = ssub.s32 2048, 2048
      %78 = vsyncadd [#allocation9], %s77
      %s79 = sshll.u32 [#allocation10], 4
      %s80 = int_to_ptr.vmem [resolvable:$true] %s79
      %85 = dma.hbm_to_vmem [thread:$0]  %s9, 2048, %s80, [#allocation9], 128, 128, 8
    $region41: #{tpu_custom_call.1} parent=1 // pred_fallthru
      _
    // Predicated region
    $region42: #{tpu_custom_call.1} parent=1 // pred_check
      _
    $region43: #{tpu_custom_call.1} parent=1 // pred_check_branch
      %87 = sbr.rel (0) target = $region45
    $region44: #{tpu_custom_call.1} parent=1 // pred_region
      _
    $region45: #{tpu_custom_call.1} parent=1 // pred_fallthru
      _
    // Predicated region
    $region46: #{tpu_custom_call.1} parent=1 // pred_check
      _
    $region47: #{tpu_custom_call.1} parent=1 // pred_check_branch
      %89 = sbr.rel (0) target = $region49
    $region48: #{tpu_custom_call.1} parent=1 // pred_region
      %90 = dma.done [#allocation3], 128
    $region49: #{tpu_custom_call.1} parent=1 // pred_fallthru
      _
    // Predicated region
    $region50: #{tpu_custom_call.1} parent=1 // pred_check
      _
    $region51: #{tpu_custom_call.1} parent=1 // pred_check_branch
      %92 = sbr.rel (0) target = $region53
    $region52: #{tpu_custom_call.1} parent=1 // pred_region
      %93 = dma.done [#allocation6], 5120
    $region53: #{tpu_custom_call.1} parent=1 // pred_fallthru
      _
    // Predicated region
    $region54: #{tpu_custom_call.1} parent=1 // pred_check
      _
    $region55: #{tpu_custom_call.1} parent=1 // pred_check_branch
      %95 = sbr.rel (0) target = $region57
    $region56: #{tpu_custom_call.1} parent=1 // pred_region
      %96 = dma.done [#allocation6], 80
    $region57: #{tpu_custom_call.1} parent=1 // pred_fallthru
      _
    // Predicated region
    $region58: #{tpu_custom_call.1} parent=1 // pred_check
      _
    $region59: #{tpu_custom_call.1} parent=1 // pred_check_branch
      %98 = sbr.rel (0) target = $region61
    $region60: #{tpu_custom_call.1} parent=1 // pred_region
      %99 = dma.done [#allocation9], 2048
    $region61: #{tpu_custom_call.1} parent=1 // pred_fallthru
      _
    // Predicated region
    $region62: #{tpu_custom_call.1} parent=1 // pred_check
      _
    $region63: #{tpu_custom_call.1} parent=1 // pred_check_branch
      %101 = sbr.rel (0) target = $region65
    $region64: #{tpu_custom_call.1} parent=1 // pred_region
      %102 = dma.done [#allocation9], 2048
    $region65: #{tpu_custom_call.1} parent=1 // pred_fallthru
      _
    %v103 = vld [vmem:[#allocation2] sm:$0xff]
    %v104 = vld [vmem:[#allocation5] sm:$0xff]
    %v105 = vld [vmem:[#allocation5 + $0x8] sm:$0xff]
    %v106 = vld [vmem:[#allocation5 + $0x10] sm:$0xff]
    %v107 = vld [vmem:[#allocation5 + $0x18] sm:$0xff]
    %v108 = vld [vmem:[#allocation5 + $0x20] sm:$0xff]
    %v109 = vld [vmem:[#allocation5 + $0x28] sm:$0xff]
    %v110 = vld [vmem:[#allocation5 + $0x30] sm:$0xff]
    %v111 = vld [vmem:[#allocation5 + $0x38] sm:$0xff]
    %v112 = vld [vmem:[#allocation5 + $0x40] sm:$0xff]
    %v113 = vld [vmem:[#allocation5 + $0x48] sm:$0xff]
    %v114 = vld [vmem:[#allocation5 + $0x50] sm:$0xff]
    %v115 = vld [vmem:[#allocation5 + $0x58] sm:$0xff]
    %v116 = vld [vmem:[#allocation5 + $0x60] sm:$0xff]
    %v117 = vld [vmem:[#allocation5 + $0x68] sm:$0xff]
    %v118 = vld [vmem:[#allocation5 + $0x70] sm:$0xff]
    %v119 = vld [vmem:[#allocation5 + $0x78] sm:$0xff]
    %v120 = vld [vmem:[#allocation5 + $0x80] sm:$0xff]
    %v121 = vld [vmem:[#allocation5 + $0x88] sm:$0xff]
    %v122 = vld [vmem:[#allocation5 + $0x90] sm:$0xff]
    %v123 = vld [vmem:[#allocation5 + $0x98] sm:$0xff]
    %v124 = vld [vmem:[#allocation5 + $0xa0] sm:$0xff]
    %v125 = vld [vmem:[#allocation5 + $0xa8] sm:$0xff]
    %v126 = vld [vmem:[#allocation5 + $0xb0] sm:$0xff]
    %v127 = vld [vmem:[#allocation5 + $0xb8] sm:$0xff]
    %v128 = vld [vmem:[#allocation5 + $0xc0] sm:$0xff]
    %v129 = vld [vmem:[#allocation5 + $0xc8] sm:$0xff]
    %v130 = vld [vmem:[#allocation5 + $0xd0] sm:$0xff]
    %v131 = vld [vmem:[#allocation5 + $0xd8] sm:$0xff]
    %v132 = vld [vmem:[#allocation5 + $0xe0] sm:$0xff]
    %v133 = vld [vmem:[#allocation5 + $0xe8] sm:$0xff]
    %v134 = vld [vmem:[#allocation5 + $0xf0] sm:$0xff]
    %v135 = vld [vmem:[#allocation5 + $0xf8] sm:$0xff]
    %v136 = vld [vmem:[#allocation5 + $0x100] sm:$0xff]
    %v137 = vld [vmem:[#allocation5 + $0x108] sm:$0xff]
    %v138 = vld [vmem:[#allocation5 + $0x110] sm:$0xff]
    %v139 = vld [vmem:[#allocation5 + $0x118] sm:$0xff]
    %v140 = vld [vmem:[#allocation5 + $0x120] sm:$0xff]
    %v141 = vld [vmem:[#allocation5 + $0x128] sm:$0xff]
    %v142 = vld [vmem:[#allocation5 + $0x130] sm:$0xff]
    %v143 = vld [vmem:[#allocation5 + $0x138] sm:$0xff]
    %v144 = vld [vmem:[#allocation7] sm:$0x1f]
    %v146 = vlaneseq
    %v147 = vshrl.u32 %v146, 7
    %v148 = vsub.s32 0, %v147
    %v149 = vrot.slane %v144, %v148
    %v150 = vlaneseq
    %v151 = vshrl.u32 %v150, 7
    %v152 = vsub.s32 1, %v151
    %v153 = vrot.slane %v144, %v152
    %v154 = vlaneseq
    %v155 = vshrl.u32 %v154, 7
    %v156 = vsub.s32 2, %v155
    %v157 = vrot.slane %v144, %v156
    %v158 = vlaneseq
    %v159 = vshrl.u32 %v158, 7
    %v160 = vsub.s32 3, %v159
    %v161 = vrot.slane %v144, %v160
    %v162 = vlaneseq
    %v163 = vshrl.u32 %v162, 7
    %v164 = vsub.s32 4, %v163
    %v165 = vrot.slane %v144, %v164
    %vm171 = vcmask 523264
    %v173 = vsel %vm171, %v103, 0
    %175 = vmatprep.subr.mxu0 0.0
    %176 = vmatpush1.msra.mxu0 0.0
    %177 = vmatprep.subr.mxu0 0.0
    %178 = vmatpush1.msra.mxu0 0.0
    %179 = vmatprep.subr.mxu0 0.0
    %180 = vmatpush1.msra.mxu0 0.0
    %181 = vmatprep.subr.mxu0 0.0
    %182 = vmatpush1.msra.mxu0 0.0
    %183 = vmatprep.subr.mxu0 0.0
    %184 = vmatpush1.msra.mxu0 0.0
    %185 = vmatprep.subr.mxu0 0.0
    %186 = vmatpush1.msra.mxu0 0.0
    %187 = vmatprep.subr.mxu0 0.0
    %188 = vmatpush1.msra.mxu0 0.0
    %189 = vmatprep.subr.mxu0 0.0
    %190 = vmatpush1.msra.mxu0 0.0
    %191 = vmatprep.subr.mxu0 %v140
    %192 = vmatpush1.msra.mxu0 %v139
    %193 = vmatprep.subr.mxu0 %v135
    %194 = vmatpush1.msra.mxu0 %v134
    %195 = vmatprep.subr.mxu0 %v130
    %196 = vmatpush1.msra.mxu0 %v129
    %197 = vmatprep.subr.mxu0 %v125
    %198 = vmatpush1.msra.mxu0 %v124
    %199 = vmatprep.subr.mxu0 %v120
    %200 = vmatpush1.msra.mxu0 %v119
    %201 = vmatprep.subr.mxu0 %v115
    %202 = vmatpush1.msra.mxu0 %v114
    %203 = vmatprep.subr.mxu0 %v110
    %204 = vmatpush1.msra.mxu0 %v109
    %205 = vmatprep.subr.mxu0 %v105
    %206 = vmatpush1.msra.mxu0 %v104
    %207 = vmatprep.subr.mxu0 0.0
    %208 = vmatpush2.msra.mxu0 0.0
    %209 = vmatprep.subr.mxu0 0.0
    %210 = vmatpush2.msra.mxu0 0.0
    %211 = vmatprep.subr.mxu0 0.0
    %212 = vmatpush2.msra.mxu0 0.0
    %213 = vmatprep.subr.mxu0 0.0
    %214 = vmatpush2.msra.mxu0 0.0
    %215 = vmatprep.subr.mxu0 0.0
    %216 = vmatpush2.msra.mxu0 0.0
    %217 = vmatprep.subr.mxu0 0.0
    %218 = vmatpush2.msra.mxu0 0.0
    %219 = vmatprep.subr.mxu0 0.0
    %220 = vmatpush2.msra.mxu0 0.0
    %221 = vmatprep.subr.mxu0 0.0
    %222 = vmatpush2.msra.mxu0 0.0
    %223 = vmatprep.subr.mxu0 0.0
    %224 = vmatpush2.msra.mxu0 0.0
    %225 = vmatprep.subr.mxu0 0.0
    %226 = vmatpush2.msra.mxu0 0.0
    %227 = vmatprep.subr.mxu0 0.0
    %228 = vmatpush2.msra.mxu0 0.0
    %229 = vmatprep.subr.mxu0 0.0
    %230 = vmatpush2.msra.mxu0 0.0
    %231 = vmatprep.subr.mxu0 0.0
    %232 = vmatpush2.msra.mxu0 0.0
    %233 = vmatprep.subr.mxu0 0.0
    %234 = vmatpush2.msra.mxu0 0.0
    %235 = vmatprep.subr.mxu0 0.0
    %236 = vmatpush2.msra.mxu0 0.0
    %237 = vmatprep.subr.mxu0 0.0
    %238 = vmatpush2.msra.mxu0 0.0
    %239 = vmatprep.mubr.f32.mxu0 0.0
    %240 = vmatmul.mubr.f32.gmra.mxu0 %v173
    %v241 = vpop.f32.mrf.mxu0
    %v242 = vadd.f32 %v149, %v241
    %v243 = vpop.f32.mrf.mxu0
    %v244 = vadd.f32 %v153, %v243
    %245 = vdwg.mxu0
    %246 = vmatprep.subr.mxu0 0.0
    %247 = vmatpush1.msra.mxu0 0.0
    %248 = vmatprep.subr.mxu0 0.0
    %249 = vmatpush1.msra.mxu0 0.0
    %250 = vmatprep.subr.mxu0 0.0
    %251 = vmatpush1.msra.mxu0 0.0
    %252 = vmatprep.subr.mxu0 0.0
    %253 = vmatpush1.msra.mxu0 0.0
    %254 = vmatprep.subr.mxu0 0.0
    %255 = vmatpush1.msra.mxu0 0.0
    %256 = vmatprep.subr.mxu0 0.0
    %257 = vmatpush1.msra.mxu0 0.0
    %258 = vmatprep.subr.mxu0 0.0
    %259 = vmatpush1.msra.mxu0 0.0
    %260 = vmatprep.subr.mxu0 0.0
    %261 = vmatpush1.msra.mxu0 0.0
    %262 = vmatprep.subr.mxu0 %v142
    %263 = vmatpush1.msra.mxu0 %v141
    %264 = vmatprep.subr.mxu0 %v137
    %265 = vmatpush1.msra.mxu0 %v136
    %266 = vmatprep.subr.mxu0 %v132
    %267 = vmatpush1.msra.mxu0 %v131
    %268 = vmatprep.subr.mxu0 %v127
    %269 = vmatpush1.msra.mxu0 %v126
    %270 = vmatprep.subr.mxu0 %v122
    %271 = vmatpush1.msra.mxu0 %v121
    %272 = vmatprep.subr.mxu0 %v117
    %273 = vmatpush1.msra.mxu0 %v116
    %274 = vmatprep.subr.mxu0 %v112
    %275 = vmatpush1.msra.mxu0 %v111
    %276 = vmatprep.subr.mxu0 %v107
    %277 = vmatpush1.msra.mxu0 %v106
    %278 = vmatprep.subr.mxu0 0.0
    %279 = vmatpush2.msra.mxu0 0.0
    %280 = vmatprep.subr.mxu0 0.0
    %281 = vmatpush2.msra.mxu0 0.0
    %282 = vmatprep.subr.mxu0 0.0
    %283 = vmatpush2.msra.mxu0 0.0
    %284 = vmatprep.subr.mxu0 0.0
    %285 = vmatpush2.msra.mxu0 0.0
    %286 = vmatprep.subr.mxu0 0.0
    %287 = vmatpush2.msra.mxu0 0.0
    %288 = vmatprep.subr.mxu0 0.0
    %289 = vmatpush2.msra.mxu0 0.0
    %290 = vmatprep.subr.mxu0 0.0
    %291 = vmatpush2.msra.mxu0 0.0
    %292 = vmatprep.subr.mxu0 0.0
    %293 = vmatpush2.msra.mxu0 0.0
    %294 = vmatprep.subr.mxu0 0.0
    %295 = vmatpush2.msra.mxu0 0.0
    %296 = vmatprep.subr.mxu0 0.0
    %297 = vmatpush2.msra.mxu0 0.0
    %298 = vmatprep.subr.mxu0 0.0
    %299 = vmatpush2.msra.mxu0 0.0
    %300 = vmatprep.subr.mxu0 0.0
    %301 = vmatpush2.msra.mxu0 0.0
    %302 = vmatprep.subr.mxu0 0.0
    %303 = vmatpush2.msra.mxu0 0.0
    %304 = vmatprep.subr.mxu0 0.0
    %305 = vmatpush2.msra.mxu0 0.0
    %306 = vmatprep.subr.mxu0 0.0
    %307 = vmatpush2.msra.mxu0 0.0
    %308 = vmatprep.subr.mxu0 0.0
    %309 = vmatpush2.msra.mxu0 0.0
    %310 = vmatprep.mubr.f32.mxu0 0.0
    %311 = vmatmul.mubr.f32.gmra.mxu0 %v173
    %v312 = vpop.f32.mrf.mxu0
    %v313 = vadd.f32 %v157, %v312
    %v314 = vpop.f32.mrf.mxu0
    %v315 = vadd.f32 %v161, %v314
    %316 = vdwg.mxu0
    %317 = vmatprep.subr.mxu0 0.0
    %318 = vmatpush1.msra.mxu0 0.0
    %319 = vmatprep.subr.mxu0 0.0
    %320 = vmatpush1.msra.mxu0 0.0
    %321 = vmatprep.subr.mxu0 0.0
    %322 = vmatpush1.msra.mxu0 0.0
    %323 = vmatprep.subr.mxu0 0.0
    %324 = vmatpush1.msra.mxu0 0.0
    %325 = vmatprep.subr.mxu0 0.0
    %326 = vmatpush1.msra.mxu0 0.0
    %327 = vmatprep.subr.mxu0 0.0
    %328 = vmatpush1.msra.mxu0 0.0
    %329 = vmatprep.subr.mxu0 0.0
    %330 = vmatpush1.msra.mxu0 0.0
    %331 = vmatprep.subr.mxu0 0.0
    %332 = vmatpush1.msra.mxu0 0.0
    %333 = vmatprep.subr.mxu0 0.0
    %334 = vmatpush1.msra.mxu0 %v143
    %335 = vmatprep.subr.mxu0 0.0
    %336 = vmatpush1.msra.mxu0 %v138
    %337 = vmatprep.subr.mxu0 0.0
    %338 = vmatpush1.msra.mxu0 %v133
    %339 = vmatprep.subr.mxu0 0.0
    %340 = vmatpush1.msra.mxu0 %v128
    %341 = vmatprep.subr.mxu0 0.0
    %342 = vmatpush1.msra.mxu0 %v123
    %343 = vmatprep.subr.mxu0 0.0
    %344 = vmatpush1.msra.mxu0 %v118
    %345 = vmatprep.subr.mxu0 0.0
    %346 = vmatpush1.msra.mxu0 %v113
    %347 = vmatprep.subr.mxu0 0.0
    %348 = vmatpush1.msra.mxu0 %v108
    %349 = vmatprep.subr.mxu0 0.0
    %350 = vmatpush2.msra.mxu0 0.0
    %351 = vmatprep.subr.mxu0 0.0
    %352 = vmatpush2.msra.mxu0 0.0
    %353 = vmatprep.subr.mxu0 0.0
    %354 = vmatpush2.msra.mxu0 0.0
    %355 = vmatprep.subr.mxu0 0.0
    %356 = vmatpush2.msra.mxu0 0.0
    %357 = vmatprep.subr.mxu0 0.0
    %358 = vmatpush2.msra.mxu0 0.0
    %359 = vmatprep.subr.mxu0 0.0
    %360 = vmatpush2.msra.mxu0 0.0
    %361 = vmatprep.subr.mxu0 0.0
    %362 = vmatpush2.msra.mxu0 0.0
    %363 = vmatprep.subr.mxu0 0.0
    %364 = vmatpush2.msra.mxu0 0.0
    %365 = vmatprep.subr.mxu0 0.0
    %366 = vmatpush2.msra.mxu0 0.0
    %367 = vmatprep.subr.mxu0 0.0
    %368 = vmatpush2.msra.mxu0 0.0
    %369 = vmatprep.subr.mxu0 0.0
    %370 = vmatpush2.msra.mxu0 0.0
    %371 = vmatprep.subr.mxu0 0.0
    %372 = vmatpush2.msra.mxu0 0.0
    %373 = vmatprep.subr.mxu0 0.0
    %374 = vmatpush2.msra.mxu0 0.0
    %375 = vmatprep.subr.mxu0 0.0
    %376 = vmatpush2.msra.mxu0 0.0
    %377 = vmatprep.subr.mxu0 0.0
    %378 = vmatpush2.msra.mxu0 0.0
    %379 = vmatprep.subr.mxu0 0.0
    %380 = vmatpush2.msra.mxu0 0.0
    %381 = vmatprep.mubr.f32.mxu0 0.0
    %382 = vmatmul.mubr.f32.gmra.mxu0 %v173
    %v383 = vpop.f32.mrf.mxu0
    %v384 = vadd.f32 %v165, %v383
    %v385 = vpop.f32.mrf.mxu0
    %386 = vdwg.mxu0
    %387 = vadd.xlane.f32.xlu0 %v242
    %v388 = vpop.xlane.xlu0 %387
    %v389 = vrcp.pop 128.0
    %v390 = vmul.f32 %v388, %v389
    %v391 = vsub.f32 %v242, %v390
    %v392 = vmul.f32 %v391, %v391
    %393 = vadd.xlane.f32.xlu0 %v392
    %v394 = vpop.xlane.xlu0 %393
    %v395 = vmul.f32 %v394, %v389
    %v396 = vadd.f32 %v395, 1e-05
    %v397 = vrsqrt.pop %v396
    %v398 = vmul.f32 %v391, %v397
    %v399 = vld [vmem:[%s3] sm:$0x1]
    %v401 = vlaneseq
    %v402 = vshrl.u32 %v401, 7
    %v403 = vsub.s32 0, %v402
    %v404 = vrot.slane %v399, %v403
    %v406 = vmul.f32 %v398, %v404
    %v407 = vld [vmem:[%s4] sm:$0x1]
    %v409 = vlaneseq
    %v410 = vshrl.u32 %v409, 7
    %v411 = vsub.s32 0, %v410
    %v412 = vrot.slane %v407, %v411
    %v414 = vadd.f32 %v406, %v412
    %v415 = vmul.f32 %v414, 0.5
    %v416 = vmul.f32 %v414, 0.70710677
    %v417 = verf.f32.pop %v416
    %v418 = vadd.f32 %v417, 1.0
    %v419 = vmul.f32 %v415, %v418
    %v420 = vmul.f32 %v419, %v244
    %v421 = vadd.f32 %v420, %v313
    %v422 = vld [vmem:[#allocation8] sm:$0xff]
    %v423 = vld [vmem:[#allocation8 + $0x8] sm:$0xff]
    %v424 = vld [vmem:[#allocation8 + $0x10] sm:$0xff]
    %v425 = vld [vmem:[#allocation8 + $0x18] sm:$0xff]
    %v426 = vld [vmem:[#allocation8 + $0x20] sm:$0xff]
    %v427 = vld [vmem:[#allocation8 + $0x28] sm:$0xff]
    %v428 = vld [vmem:[#allocation8 + $0x30] sm:$0xff]
    %v429 = vld [vmem:[#allocation8 + $0x38] sm:$0xff]
    %v430 = vld [vmem:[#allocation8 + $0x40] sm:$0xff]
    %v431 = vld [vmem:[#allocation8 + $0x48] sm:$0xff]
    %v432 = vld [vmem:[#allocation8 + $0x50] sm:$0xff]
    %v433 = vld [vmem:[#allocation8 + $0x58] sm:$0xff]
    %v434 = vld [vmem:[#allocation8 + $0x60] sm:$0xff]
    %v435 = vld [vmem:[#allocation8 + $0x68] sm:$0xff]
    %v436 = vld [vmem:[#allocation8 + $0x70] sm:$0xff]
    %v437 = vld [vmem:[#allocation8 + $0x78] sm:$0xff]
    %v438 = vld [vmem:[%s6] sm:$0x1]
    %v440 = vlaneseq
    %v441 = vshrl.u32 %v440, 7
    %v442 = vsub.s32 0, %v441
    %v443 = vrot.slane %v438, %v442
    %445 = vmatprep.subr.mxu0 0.0
    %446 = vmatpush1.msra.mxu0 %v437
    %447 = vmatprep.subr.mxu0 0.0
    %448 = vmatpush1.msra.mxu0 %v436
    %449 = vmatprep.subr.mxu0 0.0
    %450 = vmatpush1.msra.mxu0 %v435
    %451 = vmatprep.subr.mxu0 0.0
    %452 = vmatpush1.msra.mxu0 %v434
    %453 = vmatprep.subr.mxu0 0.0
    %454 = vmatpush1.msra.mxu0 %v433
    %455 = vmatprep.subr.mxu0 0.0
    %456 = vmatpush1.msra.mxu0 %v432
    %457 = vmatprep.subr.mxu0 0.0
    %458 = vmatpush1.msra.mxu0 %v431
    %459 = vmatprep.subr.mxu0 0.0
    %460 = vmatpush1.msra.mxu0 %v430
    %461 = vmatprep.subr.mxu0 0.0
    %462 = vmatpush1.msra.mxu0 %v429
    %463 = vmatprep.subr.mxu0 0.0
    %464 = vmatpush1.msra.mxu0 %v428
    %465 = vmatprep.subr.mxu0 0.0
    %466 = vmatpush1.msra.mxu0 %v427
    %467 = vmatprep.subr.mxu0 0.0
    %468 = vmatpush1.msra.mxu0 %v426
    %469 = vmatprep.subr.mxu0 0.0
    %470 = vmatpush1.msra.mxu0 %v425
    %471 = vmatprep.subr.mxu0 0.0
    %472 = vmatpush1.msra.mxu0 %v424
    %473 = vmatprep.subr.mxu0 0.0
    %474 = vmatpush1.msra.mxu0 %v423
    %475 = vmatprep.subr.mxu0 0.0
    %476 = vmatpush1.msra.mxu0 %v422
    %477 = vmatprep.subr.mxu0 0.0
    %478 = vmatpush2.msra.mxu0 0.0
    %479 = vmatprep.subr.mxu0 0.0
    %480 = vmatpush2.msra.mxu0 0.0
    %481 = vmatprep.subr.mxu0 0.0
    %482 = vmatpush2.msra.mxu0 0.0
    %483 = vmatprep.subr.mxu0 0.0
    %484 = vmatpush2.msra.mxu0 0.0
    %485 = vmatprep.subr.mxu0 0.0
    %486 = vmatpush2.msra.mxu0 0.0
    %487 = vmatprep.subr.mxu0 0.0
    %488 = vmatpush2.msra.mxu0 0.0
    %489 = vmatprep.subr.mxu0 0.0
    %490 = vmatpush2.msra.mxu0 0.0
    %491 = vmatprep.subr.mxu0 0.0
    %492 = vmatpush2.msra.mxu0 0.0
    %493 = vmatprep.subr.mxu0 0.0
    %494 = vmatpush2.msra.mxu0 0.0
    %495 = vmatprep.subr.mxu0 0.0
    %496 = vmatpush2.msra.mxu0 0.0
    %497 = vmatprep.subr.mxu0 0.0
    %498 = vmatpush2.msra.mxu0 0.0
    %499 = vmatprep.subr.mxu0 0.0
    %500 = vmatpush2.msra.mxu0 0.0
    %501 = vmatprep.subr.mxu0 0.0
    %502 = vmatpush2.msra.mxu0 0.0
    %503 = vmatprep.subr.mxu0 0.0
    %504 = vmatpush2.msra.mxu0 0.0
    %505 = vmatprep.subr.mxu0 0.0
    %506 = vmatpush2.msra.mxu0 0.0
    %507 = vmatprep.subr.mxu0 0.0
    %508 = vmatpush2.msra.mxu0 0.0
    %509 = vmatprep.mubr.f32.mxu0 0.0
    %510 = vmatmul.mubr.f32.gmra.mxu0 %v421
    %v511 = vpop.f32.mrf.mxu0
    %v512 = vadd.f32 %v443, %v511
    %v513 = vpop.f32.mrf.mxu0
    %514 = vdwg.mxu0
    %515 = vadd.xlane.f32.xlu0 %v512
    %v516 = vpop.xlane.xlu0 %515
    %v517 = vmul.f32 %v516, %v389
    %v518 = vsub.f32 %v512, %v517
    %v519 = vmul.f32 %v518, %v518
    %520 = vadd.xlane.f32.xlu0 %v519
    %v521 = vpop.xlane.xlu0 %520
    %v522 = vmul.f32 %v521, %v389
    %v523 = vadd.f32 %v522, 1e-05
    %v524 = vrsqrt.pop %v523
    %v525 = vmul.f32 %v518, %v524
    %v526 = vld [vmem:[%s7] sm:$0x1]
    %v528 = vlaneseq
    %v529 = vshrl.u32 %v528, 7
    %v530 = vsub.s32 0, %v529
    %v531 = vrot.slane %v526, %v530
    %v533 = vmul.f32 %v525, %v531
    %v534 = vld [vmem:[%s8] sm:$0x1]
    %v536 = vlaneseq
    %v537 = vshrl.u32 %v536, 7
    %v538 = vsub.s32 0, %v537
    %v539 = vrot.slane %v534, %v538
    %v541 = vadd.f32 %v533, %v539
    %v542 = vmul.f32 %v541, 0.5
    %v543 = vmul.f32 %v541, 0.70710677
    %v544 = verf.f32.pop %v543
    %v545 = vadd.f32 %v544, 1.0
    %v546 = vmul.f32 %v542, %v545
    %v547 = vmul.f32 %v546, %v315
    %v548 = vadd.f32 %v547, %v384
    %v549 = vld [vmem:[#allocation10] sm:$0xff]
    %v550 = vld [vmem:[#allocation10 + $0x8] sm:$0xff]
    %v551 = vld [vmem:[#allocation10 + $0x10] sm:$0xff]
    %v552 = vld [vmem:[#allocation10 + $0x18] sm:$0xff]
    %v553 = vld [vmem:[#allocation10 + $0x20] sm:$0xff]
    %v554 = vld [vmem:[#allocation10 + $0x28] sm:$0xff]
    %v555 = vld [vmem:[#allocation10 + $0x30] sm:$0xff]
    %v556 = vld [vmem:[#allocation10 + $0x38] sm:$0xff]
    %v557 = vld [vmem:[#allocation10 + $0x40] sm:$0xff]
    %v558 = vld [vmem:[#allocation10 + $0x48] sm:$0xff]
    %v559 = vld [vmem:[#allocation10 + $0x50] sm:$0xff]
    %v560 = vld [vmem:[#allocation10 + $0x58] sm:$0xff]
    %v561 = vld [vmem:[#allocation10 + $0x60] sm:$0xff]
    %v562 = vld [vmem:[#allocation10 + $0x68] sm:$0xff]
    %v563 = vld [vmem:[#allocation10 + $0x70] sm:$0xff]
    %v564 = vld [vmem:[#allocation10 + $0x78] sm:$0xff]
    %v565 = vld [vmem:[%s10] sm:$0x1]
    %v567 = vlaneseq
    %v568 = vshrl.u32 %v567, 7
    %v569 = vsub.s32 0, %v568
    %v570 = vrot.slane %v565, %v569
    %572 = vmatprep.subr.mxu0 0.0
    %573 = vmatpush1.msra.mxu0 %v564
    %574 = vmatprep.subr.mxu0 0.0
    %575 = vmatpush1.msra.mxu0 %v563
    %576 = vmatprep.subr.mxu0 0.0
    %577 = vmatpush1.msra.mxu0 %v562
    %578 = vmatprep.subr.mxu0 0.0
    %579 = vmatpush1.msra.mxu0 %v561
    %580 = vmatprep.subr.mxu0 0.0
    %581 = vmatpush1.msra.mxu0 %v560
    %582 = vmatprep.subr.mxu0 0.0
    %583 = vmatpush1.msra.mxu0 %v559
    %584 = vmatprep.subr.mxu0 0.0
    %585 = vmatpush1.msra.mxu0 %v558
    %586 = vmatprep.subr.mxu0 0.0
    %587 = vmatpush1.msra.mxu0 %v557
    %588 = vmatprep.subr.mxu0 0.0
    %589 = vmatpush1.msra.mxu0 %v556
    %590 = vmatprep.subr.mxu0 0.0
    %591 = vmatpush1.msra.mxu0 %v555
    %592 = vmatprep.subr.mxu0 0.0
    %593 = vmatpush1.msra.mxu0 %v554
    %594 = vmatprep.subr.mxu0 0.0
    %595 = vmatpush1.msra.mxu0 %v553
    %596 = vmatprep.subr.mxu0 0.0
    %597 = vmatpush1.msra.mxu0 %v552
    %598 = vmatprep.subr.mxu0 0.0
    %599 = vmatpush1.msra.mxu0 %v551
    %600 = vmatprep.subr.mxu0 0.0
    %601 = vmatpush1.msra.mxu0 %v550
    %602 = vmatprep.subr.mxu0 0.0
    %603 = vmatpush1.msra.mxu0 %v549
    %604 = vmatprep.subr.mxu0 0.0
    %605 = vmatpush2.msra.mxu0 0.0
    %606 = vmatprep.subr.mxu0 0.0
    %607 = vmatpush2.msra.mxu0 0.0
    %608 = vmatprep.subr.mxu0 0.0
    %609 = vmatpush2.msra.mxu0 0.0
    %610 = vmatprep.subr.mxu0 0.0
    %611 = vmatpush2.msra.mxu0 0.0
    %612 = vmatprep.subr.mxu0 0.0
    %613 = vmatpush2.msra.mxu0 0.0
    %614 = vmatprep.subr.mxu0 0.0
    %615 = vmatpush2.msra.mxu0 0.0
    %616 = vmatprep.subr.mxu0 0.0
    %617 = vmatpush2.msra.mxu0 0.0
    %618 = vmatprep.subr.mxu0 0.0
    %619 = vmatpush2.msra.mxu0 0.0
    %620 = vmatprep.subr.mxu0 0.0
    %621 = vmatpush2.msra.mxu0 0.0
    %622 = vmatprep.subr.mxu0 0.0
    %623 = vmatpush2.msra.mxu0 0.0
    %624 = vmatprep.subr.mxu0 0.0
    %625 = vmatpush2.msra.mxu0 0.0
    %626 = vmatprep.subr.mxu0 0.0
    %627 = vmatpush2.msra.mxu0 0.0
    %628 = vmatprep.subr.mxu0 0.0
    %629 = vmatpush2.msra.mxu0 0.0
    %630 = vmatprep.subr.mxu0 0.0
    %631 = vmatpush2.msra.mxu0 0.0
    %632 = vmatprep.subr.mxu0 0.0
    %633 = vmatpush2.msra.mxu0 0.0
    %634 = vmatprep.subr.mxu0 0.0
    %635 = vmatpush2.msra.mxu0 0.0
    %636 = vmatprep.mubr.f32.mxu0 0.0
    %637 = vmatmul.mubr.f32.gmra.mxu0 %v548
    %v638 = vpop.f32.mrf.mxu0
    %v639 = vadd.f32 %v570, %v638
    %v640 = vpop.f32.mrf.mxu0
    %641 = vdwg.mxu0
    %642 = vst [vmem:[#allocation11] sm:$0xff] %v639
    // Predicated region
    $region66: #{tpu_custom_call.1} parent=1 // pred_check
      _
    $region67: #{tpu_custom_call.1} parent=1 // pred_check_branch
      %644 = sbr.rel (0) target = $region69
    $region68: #{tpu_custom_call.1} parent=1 // pred_region
      %s646 = ssub.s32 128, 128
      %647 = vsyncadd [#allocation4], %s646
      %s649 = sshll.u32 [#allocation11], 4
      %s650 = int_to_ptr.vmem [resolvable:$true] %s649
      %652 = dma.vmem_to_hbm [thread:$0]  %s650, 128, %s11, [#allocation4]
    $region69: #{tpu_custom_call.1} parent=1 // pred_fallthru
      _
    // Predicated region
    $region70: #{tpu_custom_call.1} parent=1 // pred_check
      _
    $region71: #{tpu_custom_call.1} parent=1 // pred_check_branch
      %654 = sbr.rel (0) target = $region73
    $region72: #{tpu_custom_call.1} parent=1 // pred_region
      %655 = dma.done [#allocation4], 128
    $region73: #{tpu_custom_call.1} parent=1 // pred_fallthru
      _
    %656 = vsyncpa [#allocation3], 1
    %657 = vsyncpa [#allocation6], 1
    %658 = vsyncpa [#allocation9], 1
    %659 = vsyncpa [#allocation4], 1

</llo_original>
